<compile_context>
chip_gen: v5e
topology: v5e:2x2
jax: 0.10.0
libtpu: 0.0.40
codegen_flags: <defaults>
</compile_context>

<pallas_src>
import math

import jax
import jax.numpy as jnp
from jax.experimental import pallas as pl
from jax.experimental.pallas import tpu as pltpu


def _round_up(x, m):
    return ((x + m - 1) // m) * m


def tem_conv_kernel(p_ref, w_ref, b_ref, o_ref):
    """Fused (single) matmul + bias + exact GELU on a lane-dense tile.

    p_ref: [K, tile_m]    im2col patches, K = KH*KW*Cin, M on the lane axis
    w_ref: [Cout, K]      conv weight (VMEM-resident: constant index_map)
    b_ref: [Cout, 1]      bias
    o_ref: [Cout, tile_m] output tile (lane-dense store)
    """
    acc = jnp.dot(w_ref[...], p_ref[...], preferred_element_type=jnp.float32)
    acc = acc + b_ref[...].astype(jnp.float32)
    # Exact (erf-based) GELU, matching torch.nn.GELU(approximate='none').
    inv_sqrt2 = jnp.float32(1.0 / math.sqrt(2.0))
    y = 0.5 * acc * (1.0 + jax.lax.erf(acc * inv_sqrt2))
    o_ref[...] = y.astype(o_ref.dtype)


def tem_conv_forward(x_nchw, weight_oihw, bias, *, dilation=7, tile_m=512,
                     mxu_dtype=None):
    """x_nchw: [N, Cin, H, W]; weight_oihw: [Cout, Cin, KH, KW]; bias: [Cout]."""
    N, Cin, H, W = x_nchw.shape
    Cout, _, KH, KW = weight_oihw.shape
    Ho = H - dilation * (KH - 1)
    Wo = W - dilation * (KW - 1)
    assert Ho > 0 and Wo > 0, "spatial dims too small for dilated valid conv"

    K = KH * KW * Cin
    M = N * Ho * Wo

    # ---- layout plumbing in plain JAX (free for the kernel) ----------------
    # im2col: one tap slice per (kh, kw); k-order is (kh, kw, cin), m-order is
    # (n, ho, wo).  Result is lane-dense in M.
    taps = [x_nchw[:, :, i * dilation:i * dilation + Ho,
                   j * dilation:j * dilation + Wo]            # [N, Cin, Ho, Wo]
            for i in range(KH) for j in range(KW)]
    patches = jnp.stack(taps, axis=0)                         # [KH*KW, N, Cin, Ho, Wo]
    patches = jnp.transpose(patches, (0, 2, 1, 3, 4)).reshape(K, M)

    # weight -> [Cout, K] with matching (kh, kw, cin) order; bias -> [Cout, 1]
    w2d = jnp.transpose(weight_oihw, (0, 2, 3, 1)).reshape(Cout, K)
    b2d = bias.reshape(Cout, 1)

    # Single block when M is small; otherwise tile M (lane axis) in multiples
    # of 128 so stores are unmasked and VMEM stays bounded on v7x (64 MiB).
    if M <= tile_m:
        tile = M
        M_pad = M
    else:
        tile = _round_up(tile_m, 128)
        M_pad = _round_up(M, tile)
    if M_pad != M:
        patches = jnp.pad(patches, ((0, 0), (0, M_pad - M)))

    if mxu_dtype is not None:   # e.g. jnp.bfloat16 for large shapes on v6e/v7x
        patches = patches.astype(mxu_dtype)
        w2d = w2d.astype(mxu_dtype)

    grid = (M_pad // tile,)
    out2d = pl.pallas_call(
        tem_conv_kernel,
        out_shape=jax.ShapeDtypeStruct((Cout, M_pad), x_nchw.dtype),
        grid=grid,
        in_specs=[
            pl.BlockSpec((K, tile), lambda i: (0, i)),     # patches: tiled on M
            pl.BlockSpec((Cout, K), lambda i: (0, 0)),     # weight: resident
            pl.BlockSpec((Cout, 1), lambda i: (0, 0)),     # bias:   resident
        ],
        out_specs=pl.BlockSpec((Cout, tile), lambda i: (0, i)),
        compiler_params=pltpu.CompilerParams(
            dimension_semantics=("parallel",)),            # 2 TCs on v7x
    )(patches, w2d, b2d)

    out = out2d[:, :M].reshape(Cout, N, Ho, Wo)
    return jnp.transpose(out, (1, 0, 2, 3))                # back to NCHW


def _reference(x_nchw, weight_oihw, bias, *, dilation=7):
    """Pure-JAX reference: lax dilated conv + exact GELU (for validation)."""
    x_nhwc = jnp.transpose(x_nchw, (0, 2, 3, 1))
    w_hwio = jnp.transpose(weight_oihw, (2, 3, 1, 0))
    y = jax.lax.conv_general_dilated(
        x_nhwc, w_hwio,
        window_strides=(1, 1), padding="VALID",
        rhs_dilation=(dilation, dilation),
        dimension_numbers=("NHWC", "HWIO", "NHWC"))
    y = y + bias.reshape(1, 1, 1, -1)
    y = jax.nn.gelu(y, approximate=False)
    return jnp.transpose(y, (0, 3, 1, 2))


if __name__ == "__main__":
    # Module config: in_channels=4, expand_ratio=3 -> fc_chn=12, k=3, dilation=7.
    in_channels = 4
    expand_ratio = 3
    kernel_size = 3
    dilation = 7
    fc_chn = in_channels * expand_ratio

    N, H, W = 2, 16, 16  # output spatial = 16 - 7*(3-1) = 2

    key = jax.random.PRNGKey(0)
    kx, kw_, kb = jax.random.split(key, 3)

    x = jax.random.normal(kx, (N, in_channels, H, W), dtype=jnp.float32)

    # Deterministic xavier-uniform conv weight, small uniform bias.
    fan_in = in_channels * kernel_size * kernel_size
    fan_out = fc_chn * kernel_size * kernel_size
    limit = math.sqrt(6.0 / (fan_in + fan_out))
    weight = jax.random.uniform(
        kw_, (fc_chn, in_channels, kernel_size, kernel_size),
        minval=-limit, maxval=limit, dtype=jnp.float32)
    b_lim = 1.0 / math.sqrt(fan_in)
    bias = jax.random.uniform(kb, (fc_chn,), minval=-b_lim, maxval=b_lim,
                              dtype=jnp.float32)

    out = tem_conv_forward(x, weight, bias, dilation=dilation)
    out = jax.block_until_ready(out)

    ref = _reference(x, weight, bias, dilation=dilation)
    assert out.shape == (N, fc_chn, H - dilation * 2, W - dilation * 2)
    assert jnp.allclose(out, ref, atol=1e-4, rtol=1e-4), (
        float(jnp.max(jnp.abs(out - ref))))

    print("KERNEL_OK")
</pallas_src>

<mosaic_0001>
module attributes {stable_mosaic.version = 11 : i64} {
  func.func @tem_conv_kernel(%arg0: i32, %arg1: memref<36x8xf32, #tpu.memory_space<vmem>>, %arg2: memref<12x36xf32, #tpu.memory_space<vmem>>, %arg3: memref<12x1xf32, #tpu.memory_space<vmem>>, %arg4: memref<12x8xf32, #tpu.memory_space<vmem>>) attributes {dimension_semantics = [#tpu.dimension_semantics<parallel>], iteration_bounds = array<i64: 1>, scalar_prefetch = 0 : i64, scratch_operands = 0 : i64, tpu.core_type = #tpu.core_type<tc>, window_params = [{transform_indices = @transform_0, window_bounds = array<i64: 36, 8>}, {pipeline_mode = #tpu.pipeline_mode<synchronous>, transform_indices = @transform_1, window_bounds = array<i64: 12, 36>}, {pipeline_mode = #tpu.pipeline_mode<synchronous>, transform_indices = @transform_2, window_bounds = array<i64: 12, 1>}, {transform_indices = @transform_3, window_bounds = array<i64: 12, 8>}]} {
    %c0 = arith.constant 0 : index
    %c0_0 = arith.constant 0 : index
    %0 = vector.load %arg2[%c0, %c0_0] : memref<12x36xf32, #tpu.memory_space<vmem>>, vector<12x36xf32>
    %c0_1 = arith.constant 0 : index
    %c0_2 = arith.constant 0 : index
    %1 = vector.load %arg1[%c0_1, %c0_2] : memref<36x8xf32, #tpu.memory_space<vmem>>, vector<36x8xf32>
    %cst = arith.constant dense<0.000000e+00> : vector<12x8xf32>
    %2 = tpu.matmul %0, %1, %cst {dimension_numbers = #tpu.dot_dimension_numbers<[1], [0], [0], [1], [0, 0, 1, 1], [], []>} : vector<12x36xf32>, vector<36x8xf32>, vector<12x8xf32> -> vector<12x8xf32>
    %c0_3 = arith.constant 0 : index
    %c0_4 = arith.constant 0 : index
    %3 = vector.load %arg3[%c0_3, %c0_4] : memref<12x1xf32, #tpu.memory_space<vmem>>, vector<12x1xf32>
    %4 = vector.broadcast %3 : vector<12x1xf32> to vector<12x8xf32>
    %5 = arith.addf %2, %4 : vector<12x8xf32>
    %cst_5 = arith.constant 5.000000e-01 : f32
    %6 = vector.broadcast %cst_5 : f32 to vector<12x8xf32>
    %7 = arith.mulf %6, %5 : vector<12x8xf32>
    %cst_6 = arith.constant 0.707106769 : f32
    %8 = vector.broadcast %cst_6 : f32 to vector<12x8xf32>
    %9 = arith.mulf %5, %8 : vector<12x8xf32>
    %10 = math.erf %9 : vector<12x8xf32>
    %cst_7 = arith.constant 1.000000e+00 : f32
    %11 = vector.broadcast %cst_7 : f32 to vector<12x8xf32>
    %12 = arith.addf %11, %10 : vector<12x8xf32>
    %13 = arith.mulf %7, %12 : vector<12x8xf32>
    %c0_8 = arith.constant 0 : index
    %c0_9 = arith.constant 0 : index
    %14 = vector.load %arg4[%c0_8, %c0_9] : memref<12x8xf32, #tpu.memory_space<vmem>>, vector<12x8xf32>
    tpu.vector_store %arg4[%c0_8, %c0_9], %13 {strides = array<i32>} : memref<12x8xf32, #tpu.memory_space<vmem>>, vector<12x8xf32>,
    return
  }
  func.func @transform_0(%arg0: i32) -> (i32, i32) {
    %c0_i32 = arith.constant 0 : i32
    %c0_i32_0 = arith.constant 0 : i32
    return %c0_i32, %arg0 : i32, i32
  }
  func.func @transform_1(%arg0: i32) -> (i32, i32) {
    %c0_i32 = arith.constant 0 : i32
    %c0_i32_0 = arith.constant 0 : i32
    %c0_i32_1 = arith.constant 0 : i32
    return %c0_i32, %c0_i32_0 : i32, i32
  }
  func.func @transform_2(%arg0: i32) -> (i32, i32) {
    %c0_i32 = arith.constant 0 : i32
    %c0_i32_0 = arith.constant 0 : i32
    %c0_i32_1 = arith.constant 0 : i32
    return %c0_i32, %c0_i32_0 : i32, i32
  }
  func.func @transform_3(%arg0: i32) -> (i32, i32) {
    %c0_i32 = arith.constant 0 : i32
    %c0_i32_0 = arith.constant 0 : i32
    return %c0_i32, %arg0 : i32, i32
  }
}

</mosaic_0001>

<llo_original>
// kernel: tpu_custom_call.1
$region0: #{tpu_custom_call.1}
  #allocation0 [shape = 'u32[]', space=smem, size = 0x4, offset = 0x4, fixed_abs, tag = 'smem constant byte address 0x4 - core index']
  #allocation1 [shape = 'u32[72,128]{1,0:T(1,128)}', space=vmem, size = 0x9000, scoped, tag = 'internal scratch']
  %s0 = inlined_call_operand.vmem [shape: f32[36,8], index: 0, kind: input, shape index: {}]
  %s1 = inlined_call_operand.vmem [shape: f32[12,36], index: 1, kind: input, shape index: {}]
  %s2 = inlined_call_operand.vmem [shape: f32[12,1], index: 2, kind: input, shape index: {}]
  %s3 = inlined_call_operand.vmem [shape: f32[12,8], index: 3, kind: output, shape index: {}]
  %s4 = sld [smem:[#allocation0]]
  $region22: #{tpu_custom_call.1} parent=0
    _
  %s6 = ssub.s32 1, %s4
  %s7 = scalar_select 0, %s6, %s4
  // Predicated region
  $region2: #{tpu_custom_call.1} parent=0 // pred_check
    _
  $region3: #{tpu_custom_call.1} parent=0 // pred_check_branch
    %9 = sbr.rel (0) target = $region5
  $region4: #{tpu_custom_call.1} parent=0 // pred_region
    _
  $region5: #{tpu_custom_call.1} parent=0 // pred_fallthru
    _
  // Predicated region
  $region6: #{tpu_custom_call.1} parent=0 // pred_check
    _
  $region7: #{tpu_custom_call.1} parent=0 // pred_check_branch
    %11 = sbr.rel (0) target = $region9
  $region8: #{tpu_custom_call.1} parent=0 // pred_region
    _
  $region9: #{tpu_custom_call.1} parent=0 // pred_fallthru
    _
  // Predicated region
  $region10: #{tpu_custom_call.1} parent=0 // pred_check
    _
  $region11: #{tpu_custom_call.1} parent=0 // pred_check_branch
    %13 = sbr.rel (0) target = $region13
  $region12: #{tpu_custom_call.1} parent=0 // pred_region
    _
  $region13: #{tpu_custom_call.1} parent=0 // pred_fallthru
    _
  %v14 = vld [vmem:[%s1] sm:$0xff]
  %v15 = vld [vmem:[%s1 + $0x8] sm:$0xf]
  %v16 = vld [vmem:[%s0] sm:$0xff]
  %v17 = vld [vmem:[%s0 + $0x8] sm:$0xff]
  %v18 = vld [vmem:[%s0 + $0x10] sm:$0xff]
  %v19 = vld [vmem:[%s0 + $0x18] sm:$0xff]
  %v20 = vld [vmem:[%s0 + $0x20] sm:$0xf]
  %v21 = vld [vmem:[%s2] sm:$0xff]
  %v22 = vld [vmem:[%s2 + $0x8] sm:$0xf]
  %24 = vset.pattern.permute.xlu0 0
  %25 = vperm.xlu0 %24, %v21
  %v26 = vpop.permute.xlu0 %25
  %29 = vset.pattern.permute.xlu0 0
  %30 = vperm.xlu0 %29, %v22
  %v31 = vpop.permute.xlu0 %30
  %vm33 = vcmask 293888
  %v35 = vsel %vm33, %v14, 0
  %v38 = vsel %vm33, %v15, 0
  %vm40 = vcmask 1043456
  %v42 = vsel %vm40, %v20, 0
  %44 = vmatpush.msra.mxu0 0.0
  %45 = vmatpush.msra.mxu0 0.0
  %46 = vmatpush.msra.mxu0 0.0
  %47 = vmatpush.msra.mxu0 0.0
  %48 = vmatpush.msra.mxu0 0.0
  %49 = vmatpush.msra.mxu0 0.0
  %50 = vmatpush.msra.mxu0 0.0
  %51 = vmatpush.msra.mxu0 0.0
  %52 = vmatpush.msra.mxu0 0.0
  %53 = vmatpush.msra.mxu0 0.0
  %54 = vmatpush.msra.mxu0 0.0
  %55 = vmatpush.msra.mxu0 %v42
  %56 = vmatpush.msra.mxu0 %v19
  %57 = vmatpush.msra.mxu0 %v18
  %58 = vmatpush.msra.mxu0 %v17
  %59 = vmatpush.msra.mxu0 %v16
  %60 = vmatmul.f32.gmra.mxu0 %v35
  %v61 = vpop.f32.mrf.mxu0
  %v62 = vadd.f32 %v26, %v61
  %63 = vmatmul.f32.gmra.mxu0 %v38
  %v64 = vpop.f32.mrf.mxu0
  %v65 = vadd.f32 %v31, %v64
  %66 = vdwg.mxu0
  %v67 = vmul.f32 %v62, 0.5
  %v68 = vmul.f32 %v65, 0.5
  %v69 = vmul.f32 %v62, 0.70710677
  %v70 = vmul.f32 %v65, 0.70710677
  %v71 = vmul.f32 %v69, %v69
  %v72 = vmin.f32 16.0, %v71
  %v73 = vmul.f32 %v72, 2.1237322e-06
  %v74 = vadd.f32 %v73, 0.00028619796
  %v75 = vmul.f32 %v72, %v74
  %v76 = vadd.f32 %v75, 0.0036580483
  %v77 = vmul.f32 %v72, %v76
  %v78 = vadd.f32 %v77, 0.05243302
  %v79 = vmul.f32 %v72, %v78
  %v80 = vadd.f32 %v79, 0.18741608
  %v81 = vmul.f32 %v72, %v80
  %v82 = vadd.f32 %v81, 1.1283791
  %v83 = vmul.f32 %v69, %v82
  %v84 = vmul.f32 %v72, 3.8918573e-05
  %v85 = vadd.f32 %v84, 0.001143296
  %v86 = vmul.f32 %v72, %v85
  %v87 = vadd.f32 %v86, 0.014752088
  %v88 = vmul.f32 %v72, %v87
  %v89 = vadd.f32 %v88, 0.112945676
  %v90 = vmul.f32 %v72, %v89
  %v91 = vadd.f32 %v90, 0.4994258
  %v92 = vmul.f32 %v72, %v91
  %v93 = vadd.f32 %v92, 1.0
  %v94 = vrcp.pop %v93
  %v95 = vmul.f32 %v93, %v94
  %v96 = vsub.f32 1.0, %v95
  %v97 = vmul.f32 %v94, %v96
  %v98 = vadd.f32 %v94, %v97
  %vm99 = vweird.f32 %v93
  %vm100 = vweird.f32 %v94
  %vm101 = vmor %vm99, %vm100
  %v102 = vsel %vm101, %v94, %v98
  %v103 = vand.u32 2147483647, %v93
  %vm104 = vcmp.eq.f32.partialorder %v103, 8.507059e+37
  %v105 = vand.u32 %v93, 2147483648
  %v106 = vor.u32 1.1754944e-38, %v105
  %v107 = vsel %vm104, %v106, %v102
  %v108 = vmul.f32 %v83, %v107
  %v109 = vmin.f32 %v108, 1.0
  %v110 = vmax.f32 %v109, -1.0
  %v111 = vmul.f32 %v70, %v70
  %v112 = vmin.f32 16.0, %v111
  %v113 = vmul.f32 %v112, 2.1237322e-06
  %v114 = vadd.f32 %v113, 0.00028619796
  %v115 = vmul.f32 %v112, %v114
  %v116 = vadd.f32 %v115, 0.0036580483
  %v117 = vmul.f32 %v112, %v116
  %v118 = vadd.f32 %v117, 0.05243302
  %v119 = vmul.f32 %v112, %v118
  %v120 = vadd.f32 %v119, 0.18741608
  %v121 = vmul.f32 %v112, %v120
  %v122 = vadd.f32 %v121, 1.1283791
  %v123 = vmul.f32 %v70, %v122
  %v124 = vmul.f32 %v112, 3.8918573e-05
  %v125 = vadd.f32 %v124, 0.001143296
  %v126 = vmul.f32 %v112, %v125
  %v127 = vadd.f32 %v126, 0.014752088
  %v128 = vmul.f32 %v112, %v127
  %v129 = vadd.f32 %v128, 0.112945676
  %v130 = vmul.f32 %v112, %v129
  %v131 = vadd.f32 %v130, 0.4994258
  %v132 = vmul.f32 %v112, %v131
  %v133 = vadd.f32 %v132, 1.0
  %v134 = vrcp.pop %v133
  %v135 = vmul.f32 %v133, %v134
  %v136 = vsub.f32 1.0, %v135
  %v137 = vmul.f32 %v134, %v136
  %v138 = vadd.f32 %v134, %v137
  %vm139 = vweird.f32 %v133
  %vm140 = vweird.f32 %v134
  %vm141 = vmor %vm139, %vm140
  %v142 = vsel %vm141, %v134, %v138
  %v143 = vand.u32 2147483647, %v133
  %vm144 = vcmp.eq.f32.partialorder %v143, 8.507059e+37
  %v145 = vand.u32 %v133, 2147483648
  %v146 = vor.u32 1.1754944e-38, %v145
  %v147 = vsel %vm144, %v146, %v142
  %v148 = vmul.f32 %v123, %v147
  %v149 = vmin.f32 %v148, 1.0
  %v150 = vmax.f32 %v149, -1.0
  %v151 = vadd.f32 %v110, 1.0
  %v152 = vadd.f32 %v150, 1.0
  %v153 = vmul.f32 %v67, %v151
  %v154 = vmul.f32 %v68, %v152
  %vm155 = vcmask 64512
  %156 = vst.msk [vmem:[%s3] sm:$0xff] %vm155, %v153
  %vm157 = vcmask 60416
  %158 = vst.msk [vmem:[%s3 + $0x8] sm:$0xf] %vm157, %v154
  // Predicated region
  $region14: #{tpu_custom_call.1} parent=0 // pred_check
    _
  $region15: #{tpu_custom_call.1} parent=0 // pred_check_branch
    %160 = sbr.rel (0) target = $region17
  $region16: #{tpu_custom_call.1} parent=0 // pred_region
    _
  $region17: #{tpu_custom_call.1} parent=0 // pred_fallthru
    _
  // Predicated region
  $region18: #{tpu_custom_call.1} parent=0 // pred_check
    _
  $region19: #{tpu_custom_call.1} parent=0 // pred_check_branch
    %162 = sbr.rel (0) target = $region21
  $region20: #{tpu_custom_call.1} parent=0 // pred_region
    _
  $region21: #{tpu_custom_call.1} parent=0 // pred_fallthru
    _

</llo_original>
